<compile_context>
chip_gen: v7x
topology: tpu7x:2x2x1
jax: 0.10.0
libtpu: 0.0.40
codegen_flags: <defaults>
</compile_context>

<pallas_src>
import functools
import math

import jax
import jax.numpy as jnp
from jax import lax
from jax.experimental import pallas as pl
from jax.experimental.pallas import tpu as pltpu


def _round_up(x, m):
    return ((x + m - 1) // m) * m


# -----------------------------------------------------------------------------
# Kernel 1: fused QKV projection (Q rows of the packed weight are pre-scaled,
# head dim padded to Hp so the output lane slices are 128-aligned).
# -----------------------------------------------------------------------------
def _qkv_proj_kernel(x_ref, wqkv_ref, q_ref, k_ref, v_ref, *, hp):
    x = x_ref[0]                         # (tm, E)
    w = wqkv_ref[...]                    # (3*Hp, E)
    # y = x @ w.T without materializing the transpose: contract on E.
    y = lax.dot_general(x, w, (((1,), (1,)), ((), ())),
                        preferred_element_type=jnp.float32)   # (tm, 3*Hp) f32
    q_ref[0] = y[:, 0 * hp:1 * hp].astype(q_ref.dtype)
    k_ref[0] = y[:, 1 * hp:2 * hp].astype(k_ref.dtype)
    v_ref[0] = y[:, 2 * hp:3 * hp].astype(v_ref.dtype)


# -----------------------------------------------------------------------------
# Kernel 2: flash attention (online softmax over KV tiles, padded-KV masking).
# -----------------------------------------------------------------------------
def _flash_attn_kernel(q_ref, k_ref, v_ref, o_ref, m_sc, l_sc, acc_sc,
                       *, kv_len, block_k, mask_kv):
    kv = pl.program_id(2)

    @pl.when(kv == 0)
    def _init():
        m_sc[...] = jnp.full_like(m_sc, -jnp.inf)
        l_sc[...] = jnp.zeros_like(l_sc)
        acc_sc[...] = jnp.zeros_like(acc_sc)

    q = q_ref[0]                         # (tq, Hp), 1/sqrt(H) already folded in
    k = k_ref[0]                         # (tk, Hp)
    v = v_ref[0]                         # (tk, Hp)

    # s = q @ k.T : contract both operands on Hp -> (tq, tk), f32 accumulation.
    s = lax.dot_general(q, k, (((1,), (1,)), ((), ())),
                        preferred_element_type=jnp.float32)

    if mask_kv:
        # Mask padded KV columns (T was padded up to a multiple of block_k).
        col = kv * block_k + lax.broadcasted_iota(jnp.int32, s.shape, 1)
        s = jnp.where(col < kv_len, s, jnp.float32(-jnp.inf))

    m_prev = m_sc[...]                                           # (tq, 1)
    m_new = jnp.maximum(m_prev, jnp.max(s, axis=-1, keepdims=True))
    alpha = jnp.exp(m_prev - m_new)                              # (tq, 1)
    p = jnp.exp(s - m_new)                                       # (tq, tk) f32

    l_sc[...] = alpha * l_sc[...] + jnp.sum(p, axis=-1, keepdims=True)
    acc_sc[...] = alpha * acc_sc[...] + lax.dot_general(
        p.astype(v.dtype), v, (((1,), (0,)), ((), ())),
        preferred_element_type=jnp.float32)
    m_sc[...] = m_new

    @pl.when(kv == pl.num_programs(2) - 1)
    def _finalize():
        inv_l = pl.reciprocal(l_sc[...], approx=True)            # EUP slot
        o_ref[0] = (acc_sc[...] * inv_l).astype(o_ref.dtype)


def make_attention_head(wq, wk, wv, *, q_tile=512, kv_tile=1024,
                        compute_dtype=jnp.bfloat16,
                        vmem_limit_bytes=48 * 1024 * 1024):
    """Builds a jitted forward(x) for a single attention head.

    wq / wk / wv: (H, E) torch nn.Linear weights.  Weight packing (f32 scale
    fold + head-dim padding to a lane-dense multiple of 128 + bf16 cast) is
    done once here, outside the per-forward path.
    """
    H, E = wq.shape
    Hp = max(128, _round_up(H, 128))     # lane-dense padded head dim

    scale = 1.0 / math.sqrt(H)           # fold the score scale into Wq, in f32

    def _pad_head(w):
        return jnp.pad(w.astype(jnp.float32), ((0, Hp - H), (0, 0)))

    wqkv = jnp.concatenate(
        [_pad_head(wq) * scale, _pad_head(wk), _pad_head(wv)], axis=0
    ).astype(compute_dtype)              # (3*Hp, E), computed once

    cdt_size = jnp.dtype(compute_dtype).itemsize

    def forward(x):
        B, T, E_in = x.shape
        assert E_in == E, "embedding dim mismatch"
        out_dtype = x.dtype
        out_size = jnp.dtype(out_dtype).itemsize

        # ---- tile selection (padding-based; never produces (T,T) temps) ----
        T8 = _round_up(T, 8)
        tk = min(kv_tile, T8)
        tq = tk
        if tk > q_tile:
            # largest multiple-of-8 divisor of tk that is <= q_tile
            for d in range(min(q_tile, tk), 7, -1):
                if tk % d == 0 and d % 8 == 0:
                    tq = d
                    break
        T_pad = _round_up(T, tk)         # tq | tk | T_pad by construction
        tm = tk                          # projection row tile
        mask_kv = (T_pad != T)

        xc = x.astype(compute_dtype)
        if T_pad != T:
            xc = jnp.pad(xc, ((0, 0), (0, T_pad - T), (0, 0)))

        # ---------------- QKV projection ----------------
        proj_cost = pl.CostEstimate(
            flops=2 * B * T_pad * E * 3 * Hp,
            transcendentals=0,
            bytes_accessed=(B * T_pad * E + 3 * Hp * E
                            + 3 * B * T_pad * Hp) * cdt_size)

        q, k, v = pl.pallas_call(
            functools.partial(_qkv_proj_kernel, hp=Hp),
            out_shape=(jax.ShapeDtypeStruct((B, T_pad, Hp), compute_dtype),) * 3,
            grid_spec=pltpu.PrefetchScalarGridSpec(
                num_scalar_prefetch=0,
                grid=(B, T_pad // tm),
                in_specs=[
                    pl.BlockSpec((1, tm, E), lambda b, i: (b, i, 0)),
                    pl.BlockSpec((3 * Hp, E), lambda b, i: (0, 0)),
                ],
                out_specs=[
                    pl.BlockSpec((1, tm, Hp), lambda b, i: (b, i, 0)),
                    pl.BlockSpec((1, tm, Hp), lambda b, i: (b, i, 0)),
                    pl.BlockSpec((1, tm, Hp), lambda b, i: (b, i, 0)),
                ],
            ),
            compiler_params=pltpu.CompilerParams(
                dimension_semantics=("parallel", "parallel"),
                vmem_limit_bytes=vmem_limit_bytes),
            cost_estimate=proj_cost,
        )(xc, wqkv)

        # ---------------- Flash attention ----------------
        n_q = T_pad // tq
        attn_cost = pl.CostEstimate(
            flops=4 * B * T_pad * T_pad * Hp,
            transcendentals=B * T_pad * T_pad,
            # Q read once, K/V re-read once per q-tile, output written once.
            bytes_accessed=(B * T_pad * Hp * (1 + 2 * n_q) * cdt_size
                            + B * T_pad * Hp * out_size))

        out = pl.pallas_call(
            functools.partial(_flash_attn_kernel, kv_len=T, block_k=tk,
                              mask_kv=mask_kv),
            out_shape=jax.ShapeDtypeStruct((B, T_pad, Hp), out_dtype),
            grid_spec=pltpu.PrefetchScalarGridSpec(
                num_scalar_prefetch=0,
                grid=(B, n_q, T_pad // tk),
                in_specs=[
                    pl.BlockSpec((1, tq, Hp), lambda b, i, j: (b, i, 0)),
                    pl.BlockSpec((1, tk, Hp), lambda b, i, j: (b, j, 0)),
                    pl.BlockSpec((1, tk, Hp), lambda b, i, j: (b, j, 0)),
                ],
                out_specs=pl.BlockSpec((1, tq, Hp), lambda b, i, j: (b, i, 0)),
                scratch_shapes=[
                    pltpu.VMEM((tq, 1), jnp.float32),    # running max m
                    pltpu.VMEM((tq, 1), jnp.float32),    # running denom l
                    pltpu.VMEM((tq, Hp), jnp.float32),   # output accumulator
                ],
            ),
            compiler_params=pltpu.CompilerParams(
                dimension_semantics=("parallel", "parallel", "arbitrary"),
                vmem_limit_bytes=vmem_limit_bytes),
            cost_estimate=attn_cost,
        )(q, k, v)

        # Drop the row (seq) and lane (head) padding with a cheap XLA slice.
        return out[:, :T, :H]

    return jax.jit(forward)


def attention_head_ref(x, wq, wk, wv):
    q = x @ wq.T
    k = x @ wk.T
    v = x @ wv.T
    scores = jnp.einsum("btd,bsd->bts", q, k) / math.sqrt(wq.shape[0])
    attn = jax.nn.softmax(scores, axis=-1)
    return jnp.einsum("bts,bsd->btd", attn, v)


if __name__ == "__main__":
    B, T, E, H = 2, 8, 32, 16  # batch, seq, dim_embedding, dim_head

    key = jax.random.PRNGKey(0)
    kx, kq, kk, kvw = jax.random.split(key, 4)
    x = jax.random.normal(kx, (B, T, E), dtype=jnp.float32)
    # Deterministic "Kaiming-uniform-like" init for nn.Linear weights (H, E)
    bound = 1.0 / math.sqrt(E)
    wq = jax.random.uniform(kq, (H, E), jnp.float32, -bound, bound)
    wk = jax.random.uniform(kk, (H, E), jnp.float32, -bound, bound)
    wv = jax.random.uniform(kvw, (H, E), jnp.float32, -bound, bound)

    attn = make_attention_head(wq, wk, wv)          # weights packed once
    out = jax.block_until_ready(attn(x))
    ref = jax.block_until_ready(attention_head_ref(x, wq, wk, wv))

    assert out.shape == (B, T, H)
    assert out.dtype == x.dtype
    # Tolerance covers the bf16 MXU path and the approximate (EUP) reciprocal
    # in the softmax epilogue (f32 reference).
    assert jnp.allclose(out, ref, atol=3e-2, rtol=3e-2), "mismatch vs reference"
    print("KERNEL_OK")
</pallas_src>

<mosaic_0001>
module attributes {stable_mosaic.version = 11 : i64} {
  func.func @_flash_attn_kernel(%arg0: i32, %arg1: i32, %arg2: i32, %arg3: memref<1x8x128xbf16, #tpu.memory_space<vmem>>, %arg4: memref<1x8x128xbf16, #tpu.memory_space<vmem>>, %arg5: memref<1x8x128xbf16, #tpu.memory_space<vmem>>, %arg6: memref<1x8x128xf32, #tpu.memory_space<vmem>>, %arg7: memref<8x1xf32, #tpu.memory_space<vmem>>, %arg8: memref<8x1xf32, #tpu.memory_space<vmem>>, %arg9: memref<8x128xf32, #tpu.memory_space<vmem>>) attributes {dimension_semantics = [#tpu.dimension_semantics<parallel>, #tpu.dimension_semantics<parallel>, #tpu.dimension_semantics<arbitrary>], iteration_bounds = array<i64: 2, 1, 1>, scalar_prefetch = 0 : i64, scratch_operands = 3 : i64, tpu.core_type = #tpu.core_type<tc>, window_params = [{transform_indices = @transform_0, window_bounds = array<i64: 1, 8, 128>}, {transform_indices = @transform_1, window_bounds = array<i64: 1, 8, 128>}, {transform_indices = @transform_2, window_bounds = array<i64: 1, 8, 128>}, {transform_indices = @transform_3, window_bounds = array<i64: 1, 8, 128>}]} {
    %c0_i32 = arith.constant 0 : i32
    %0 = arith.cmpi eq, %arg2, %c0_i32 : i32
    %1 = arith.extui %0 : i1 to i32
    %c0_i32_0 = arith.constant 0 : i32
    %2 = arith.cmpi ne, %1, %c0_i32_0 : i32
    scf.if %2 {
      %cst_26 = arith.constant 0xFF800000 : f32
      %36 = vector.broadcast %cst_26 : f32 to vector<8x1xf32>
      %c0_27 = arith.constant 0 : index
      %c0_28 = arith.constant 0 : index
      %37 = vector.load %arg7[%c0_27, %c0_28] : memref<8x1xf32, #tpu.memory_space<vmem>>, vector<8x1xf32>
      tpu.vector_store %arg7[%c0_27, %c0_28], %36 {strides = array<i32>} : memref<8x1xf32, #tpu.memory_space<vmem>>, vector<8x1xf32>,
      %cst_29 = arith.constant 0.000000e+00 : f32
      %38 = vector.broadcast %cst_29 : f32 to vector<8x1xf32>
      %c0_30 = arith.constant 0 : index
      %c0_31 = arith.constant 0 : index
      %39 = vector.load %arg8[%c0_30, %c0_31] : memref<8x1xf32, #tpu.memory_space<vmem>>, vector<8x1xf32>
      tpu.vector_store %arg8[%c0_30, %c0_31], %38 {strides = array<i32>} : memref<8x1xf32, #tpu.memory_space<vmem>>, vector<8x1xf32>,
      %cst_32 = arith.constant 0.000000e+00 : f32
      %40 = vector.broadcast %cst_32 : f32 to vector<8x128xf32>
      %c0_33 = arith.constant 0 : index
      %c0_34 = arith.constant 0 : index
      %41 = vector.load %arg9[%c0_33, %c0_34] : memref<8x128xf32, #tpu.memory_space<vmem>>, vector<8x128xf32>
      tpu.vector_store %arg9[%c0_33, %c0_34], %40 {strides = array<i32>} : memref<8x128xf32, #tpu.memory_space<vmem>>, vector<8x128xf32>,
    } else {
    }
    %c0 = arith.constant 0 : index
    %c0_1 = arith.constant 0 : index
    %c0_2 = arith.constant 0 : index
    %3 = vector.load %arg3[%c0, %c0_1, %c0_2] : memref<1x8x128xbf16, #tpu.memory_space<vmem>>, vector<1x8x128xbf16>
    %4 = vector.shape_cast %3 : vector<1x8x128xbf16> to vector<8x128xbf16>
    %c0_3 = arith.constant 0 : index
    %c0_4 = arith.constant 0 : index
    %c0_5 = arith.constant 0 : index
    %5 = vector.load %arg4[%c0_3, %c0_4, %c0_5] : memref<1x8x128xbf16, #tpu.memory_space<vmem>>, vector<1x8x128xbf16>
    %6 = vector.shape_cast %5 : vector<1x8x128xbf16> to vector<8x128xbf16>
    %c0_6 = arith.constant 0 : index
    %c0_7 = arith.constant 0 : index
    %c0_8 = arith.constant 0 : index
    %7 = vector.load %arg5[%c0_6, %c0_7, %c0_8] : memref<1x8x128xbf16, #tpu.memory_space<vmem>>, vector<1x8x128xbf16>
    %8 = vector.shape_cast %7 : vector<1x8x128xbf16> to vector<8x128xbf16>
    %cst = arith.constant dense<0.000000e+00> : vector<8x8xf32>
    %9 = tpu.matmul %4, %6, %cst {dimension_numbers = #tpu.dot_dimension_numbers<[1], [1], [0], [0], [0, 0, 1, 0], [], []>} : vector<8x128xbf16>, vector<8x128xbf16>, vector<8x8xf32> -> vector<8x8xf32>
    %c0_9 = arith.constant 0 : index
    %c0_10 = arith.constant 0 : index
    %10 = vector.load %arg7[%c0_9, %c0_10] : memref<8x1xf32, #tpu.memory_space<vmem>>, vector<8x1xf32>
    %cst_11 = arith.constant dense<0xFF800000> : vector<8xf32>
    %11 = vector.multi_reduction <maximumf>, %9, %cst_11 [1] : vector<8x8xf32> to vector<8xf32>
    %12 = vector.shape_cast %11 : vector<8xf32> to vector<8x1xf32>
    %13 = arith.maximumf %10, %12 : vector<8x1xf32>
    %14 = arith.subf %10, %13 : vector<8x1xf32>
    %15 = math.exp %14 : vector<8x1xf32>
    %16 = vector.broadcast %13 : vector<8x1xf32> to vector<8x8xf32>
    %17 = arith.subf %9, %16 : vector<8x8xf32>
    %18 = math.exp %17 : vector<8x8xf32>
    %c0_12 = arith.constant 0 : index
    %c0_13 = arith.constant 0 : index
    %19 = vector.load %arg8[%c0_12, %c0_13] : memref<8x1xf32, #tpu.memory_space<vmem>>, vector<8x1xf32>
    %20 = arith.mulf %15, %19 : vector<8x1xf32>
    %cst_14 = arith.constant dense<0.000000e+00> : vector<8xf32>
    %21 = vector.multi_reduction <add>, %18, %cst_14 [1] : vector<8x8xf32> to vector<8xf32>
    %22 = vector.shape_cast %21 : vector<8xf32> to vector<8x1xf32>
    %23 = arith.addf %20, %22 : vector<8x1xf32>
    %c0_15 = arith.constant 0 : index
    %c0_16 = arith.constant 0 : index
    %24 = vector.load %arg8[%c0_15, %c0_16] : memref<8x1xf32, #tpu.memory_space<vmem>>, vector<8x1xf32>
    tpu.vector_store %arg8[%c0_15, %c0_16], %23 {strides = array<i32>} : memref<8x1xf32, #tpu.memory_space<vmem>>, vector<8x1xf32>,
    %c0_17 = arith.constant 0 : index
    %c0_18 = arith.constant 0 : index
    %25 = vector.load %arg9[%c0_17, %c0_18] : memref<8x128xf32, #tpu.memory_space<vmem>>, vector<8x128xf32>
    %26 = vector.broadcast %15 : vector<8x1xf32> to vector<8x128xf32>
    %27 = arith.mulf %26, %25 : vector<8x128xf32>
    %28 = arith.truncf %18 : vector<8x8xf32> to vector<8x8xbf16>
    %cst_19 = arith.constant dense<0.000000e+00> : vector<8x128xf32>
    %29 = tpu.matmul %28, %8, %cst_19 {dimension_numbers = #tpu.dot_dimension_numbers<[1], [0], [0], [1], [0, 0, 1, 1], [], []>} : vector<8x8xbf16>, vector<8x128xbf16>, vector<8x128xf32> -> vector<8x128xf32>
    %30 = arith.addf %27, %29 : vector<8x128xf32>
    %c0_20 = arith.constant 0 : index
    %c0_21 = arith.constant 0 : index
    %31 = vector.load %arg9[%c0_20, %c0_21] : memref<8x128xf32, #tpu.memory_space<vmem>>, vector<8x128xf32>
    tpu.vector_store %arg9[%c0_20, %c0_21], %30 {strides = array<i32>} : memref<8x128xf32, #tpu.memory_space<vmem>>, vector<8x128xf32>,
    %c0_22 = arith.constant 0 : index
    %c0_23 = arith.constant 0 : index
    %32 = vector.load %arg7[%c0_22, %c0_23] : memref<8x1xf32, #tpu.memory_space<vmem>>, vector<8x1xf32>
    tpu.vector_store %arg7[%c0_22, %c0_23], %13 {strides = array<i32>} : memref<8x1xf32, #tpu.memory_space<vmem>>, vector<8x1xf32>,
    %c0_i32_24 = arith.constant 0 : i32
    %33 = arith.cmpi eq, %arg2, %c0_i32_24 : i32
    %34 = arith.extui %33 : i1 to i32
    %c0_i32_25 = arith.constant 0 : i32
    %35 = arith.cmpi ne, %34, %c0_i32_25 : i32
    scf.if %35 {
      %c0_26 = arith.constant 0 : index
      %c0_27 = arith.constant 0 : index
      %36 = vector.load %arg8[%c0_26, %c0_27] : memref<8x1xf32, #tpu.memory_space<vmem>>, vector<8x1xf32>
      %37 = tpu.reciprocal %36 {approx = true} : vector<8x1xf32> -> vector<8x1xf32>
      %c0_28 = arith.constant 0 : index
      %c0_29 = arith.constant 0 : index
      %38 = vector.load %arg9[%c0_28, %c0_29] : memref<8x128xf32, #tpu.memory_space<vmem>>, vector<8x128xf32>
      %39 = vector.broadcast %37 : vector<8x1xf32> to vector<8x128xf32>
      %40 = arith.mulf %38, %39 : vector<8x128xf32>
      %c0_30 = arith.constant 0 : index
      %c0_31 = arith.constant 0 : index
      %c0_32 = arith.constant 0 : index
      %41 = vector.load %arg6[%c0_30, %c0_31, %c0_32] : memref<1x8x128xf32, #tpu.memory_space<vmem>>, vector<1x8x128xf32>
      %42 = vector.shape_cast %41 : vector<1x8x128xf32> to vector<8x128xf32>
      %43 = vector.shape_cast %40 : vector<8x128xf32> to vector<1x8x128xf32>
      tpu.vector_store %arg6[%c0_30, %c0_31, %c0_32], %43 {strides = array<i32>} : memref<1x8x128xf32, #tpu.memory_space<vmem>>, vector<1x8x128xf32>,
    } else {
    }
    return
  }
  func.func @transform_0(%arg0: i32, %arg1: i32, %arg2: i32) -> (i32, i32, i32) {
    %c0_i32 = arith.constant 0 : i32
    %c0_i32_0 = arith.constant 0 : i32
    return %arg0, %arg1, %c0_i32 : i32, i32, i32
  }
  func.func @transform_1(%arg0: i32, %arg1: i32, %arg2: i32) -> (i32, i32, i32) {
    %c0_i32 = arith.constant 0 : i32
    %c0_i32_0 = arith.constant 0 : i32
    return %arg0, %arg2, %c0_i32 : i32, i32, i32
  }
  func.func @transform_2(%arg0: i32, %arg1: i32, %arg2: i32) -> (i32, i32, i32) {
    %c0_i32 = arith.constant 0 : i32
    %c0_i32_0 = arith.constant 0 : i32
    return %arg0, %arg2, %c0_i32 : i32, i32, i32
  }
  func.func @transform_3(%arg0: i32, %arg1: i32, %arg2: i32) -> (i32, i32, i32) {
    %c0_i32 = arith.constant 0 : i32
    %c0_i32_0 = arith.constant 0 : i32
    return %arg0, %arg1, %c0_i32 : i32, i32, i32
  }
}

module attributes {stable_mosaic.version = 11 : i64} {
  func.func @_qkv_proj_kernel(%arg0: i32, %arg1: i32, %arg2: memref<1x8x32xbf16, #tpu.memory_space<vmem>>, %arg3: memref<384x32xbf16, #tpu.memory_space<vmem>>, %arg4: memref<1x8x128xbf16, #tpu.memory_space<vmem>>, %arg5: memref<1x8x128xbf16, #tpu.memory_space<vmem>>, %arg6: memref<1x8x128xbf16, #tpu.memory_space<vmem>>) attributes {dimension_semantics = [#tpu.dimension_semantics<parallel>, #tpu.dimension_semantics<parallel>], iteration_bounds = array<i64: 2, 1>, scalar_prefetch = 0 : i64, scratch_operands = 0 : i64, tpu.core_type = #tpu.core_type<tc>, window_params = [{transform_indices = @transform_0, window_bounds = array<i64: 1, 8, 32>}, {pipeline_mode = #tpu.pipeline_mode<synchronous>, transform_indices = @transform_1, window_bounds = array<i64: 384, 32>}, {transform_indices = @transform_2, window_bounds = array<i64: 1, 8, 128>}, {transform_indices = @transform_3, window_bounds = array<i64: 1, 8, 128>}, {transform_indices = @transform_4, window_bounds = array<i64: 1, 8, 128>}]} {
    %c0 = arith.constant 0 : index
    %c0_0 = arith.constant 0 : index
    %c0_1 = arith.constant 0 : index
    %0 = vector.load %arg2[%c0, %c0_0, %c0_1] : memref<1x8x32xbf16, #tpu.memory_space<vmem>>, vector<1x8x32xbf16>
    %1 = vector.shape_cast %0 : vector<1x8x32xbf16> to vector<8x32xbf16>
    %c0_2 = arith.constant 0 : index
    %c0_3 = arith.constant 0 : index
    %2 = vector.load %arg3[%c0_2, %c0_3] : memref<384x32xbf16, #tpu.memory_space<vmem>>, vector<384x32xbf16>
    %cst = arith.constant dense<0.000000e+00> : vector<8x384xf32>
    %3 = tpu.matmul %1, %2, %cst {dimension_numbers = #tpu.dot_dimension_numbers<[1], [1], [0], [0], [0, 0, 1, 0], [], []>} : vector<8x32xbf16>, vector<384x32xbf16>, vector<8x384xf32> -> vector<8x384xf32>
    %4 = vector.extract_strided_slice %3 {offsets = [0, 0], sizes = [8, 128], strides = [1, 1]} : vector<8x384xf32> to vector<8x128xf32>
    %5 = arith.truncf %4 : vector<8x128xf32> to vector<8x128xbf16>
    %c0_4 = arith.constant 0 : index
    %c0_5 = arith.constant 0 : index
    %c0_6 = arith.constant 0 : index
    %6 = vector.load %arg4[%c0_4, %c0_5, %c0_6] : memref<1x8x128xbf16, #tpu.memory_space<vmem>>, vector<1x8x128xbf16>
    %7 = vector.shape_cast %6 : vector<1x8x128xbf16> to vector<8x128xbf16>
    %8 = vector.shape_cast %5 : vector<8x128xbf16> to vector<1x8x128xbf16>
    tpu.vector_store %arg4[%c0_4, %c0_5, %c0_6], %8 {strides = array<i32>} : memref<1x8x128xbf16, #tpu.memory_space<vmem>>, vector<1x8x128xbf16>,
    %9 = vector.extract_strided_slice %3 {offsets = [0, 128], sizes = [8, 128], strides = [1, 1]} : vector<8x384xf32> to vector<8x128xf32>
    %10 = arith.truncf %9 : vector<8x128xf32> to vector<8x128xbf16>
    %c0_7 = arith.constant 0 : index
    %c0_8 = arith.constant 0 : index
    %c0_9 = arith.constant 0 : index
    %11 = vector.load %arg5[%c0_7, %c0_8, %c0_9] : memref<1x8x128xbf16, #tpu.memory_space<vmem>>, vector<1x8x128xbf16>
    %12 = vector.shape_cast %11 : vector<1x8x128xbf16> to vector<8x128xbf16>
    %13 = vector.shape_cast %10 : vector<8x128xbf16> to vector<1x8x128xbf16>
    tpu.vector_store %arg5[%c0_7, %c0_8, %c0_9], %13 {strides = array<i32>} : memref<1x8x128xbf16, #tpu.memory_space<vmem>>, vector<1x8x128xbf16>,
    %14 = vector.extract_strided_slice %3 {offsets = [0, 256], sizes = [8, 128], strides = [1, 1]} : vector<8x384xf32> to vector<8x128xf32>
    %15 = arith.truncf %14 : vector<8x128xf32> to vector<8x128xbf16>
    %c0_10 = arith.constant 0 : index
    %c0_11 = arith.constant 0 : index
    %c0_12 = arith.constant 0 : index
    %16 = vector.load %arg6[%c0_10, %c0_11, %c0_12] : memref<1x8x128xbf16, #tpu.memory_space<vmem>>, vector<1x8x128xbf16>
    %17 = vector.shape_cast %16 : vector<1x8x128xbf16> to vector<8x128xbf16>
    %18 = vector.shape_cast %15 : vector<8x128xbf16> to vector<1x8x128xbf16>
    tpu.vector_store %arg6[%c0_10, %c0_11, %c0_12], %18 {strides = array<i32>} : memref<1x8x128xbf16, #tpu.memory_space<vmem>>, vector<1x8x128xbf16>,
    return
  }
  func.func @transform_0(%arg0: i32, %arg1: i32) -> (i32, i32, i32) {
    %c0_i32 = arith.constant 0 : i32
    %c0_i32_0 = arith.constant 0 : i32
    return %arg0, %arg1, %c0_i32 : i32, i32, i32
  }
  func.func @transform_1(%arg0: i32, %arg1: i32) -> (i32, i32) {
    %c0_i32 = arith.constant 0 : i32
    %c0_i32_0 = arith.constant 0 : i32
    %c0_i32_1 = arith.constant 0 : i32
    return %c0_i32, %c0_i32_0 : i32, i32
  }
  func.func @transform_2(%arg0: i32, %arg1: i32) -> (i32, i32, i32) {
    %c0_i32 = arith.constant 0 : i32
    %c0_i32_0 = arith.constant 0 : i32
    return %arg0, %arg1, %c0_i32 : i32, i32, i32
  }
  func.func @transform_3(%arg0: i32, %arg1: i32) -> (i32, i32, i32) {
    %c0_i32 = arith.constant 0 : i32
    %c0_i32_0 = arith.constant 0 : i32
    return %arg0, %arg1, %c0_i32 : i32, i32, i32
  }
  func.func @transform_4(%arg0: i32, %arg1: i32) -> (i32, i32, i32) {
    %c0_i32 = arith.constant 0 : i32
    %c0_i32_0 = arith.constant 0 : i32
    return %arg0, %arg1, %c0_i32 : i32, i32, i32
  }
}

</mosaic_0001>

<llo_original>
// kernel: forward.3
$region0: #{forward.3}
  #allocation0 [shape = 'u32[]', space=smem, size = 0x4, offset = 0x4, fixed_abs, tag = 'smem constant byte address 0x4 - core index']
  #allocation1 [shape = 'u32[144,128]{1,0:T(1,128)}', space=vmem, size = 0x12000, scoped, tag = 'internal scratch']
  #allocation2 [shape = 'f32[8,1]{1,0:T(8,128)}', space=vmem, size = 0x1000, scoped, tag = 'scratch operand']
  #allocation3 [shape = 'f32[8,1]{1,0:T(8,128)}', space=vmem, size = 0x1000, scoped, tag = 'scratch operand']
  #allocation4 [shape = 'f32[8,128]{1,0:T(8,128)}', space=vmem, size = 0x1000, scoped, tag = 'scratch operand']
  %s0 = inlined_call_operand.vmem [shape: bf16[2,8,128], index: 0, kind: input, shape index: {}]
  %s1 = inlined_call_operand.vmem [shape: bf16[2,8,128], index: 1, kind: input, shape index: {}]
  %s2 = inlined_call_operand.vmem [shape: bf16[2,8,128], index: 2, kind: input, shape index: {}]
  %s3 = inlined_call_operand.hbm [shape: f32[2,8,128], index: 3, kind: output, shape index: {}]
  %s4 = sld [smem:[#allocation0]]
  $region53: #{forward.3} parent=0
    _
  %s6 = ssub.s32 1, %s4
  %s7 = scalar_select 0, %s6, %s4
  $region1: #{forward.3} parent=0
    #allocation5 [shape = 'u8[8192]{0}', space=vmem, size = 0x2000, scoped, tag = 'output window, operand 0']
    #allocation6 [shape = 's32[2]{0}', space=sflag, size = 0x8, scoped, tag = 'scoped memory for forward.3']
    %8 = vsyncpa [#allocation6], 0
    %s9 = scalar_lea.sflag [#allocation6], 1
    %10 = vsyncpa %s9, 0
    loop: start=0, step=1, limit=4
    $region2: #{forward.3} parent=1 // loop_pre_header
      _
    $region3: #{forward.3} parent=1 // loop_header
      %s12 = sphi 0, %s16
      %p13 = scmp.ge.s32.totalorder %s12, 4
      %s19 = sphi 0, %s38
      %s20 = sphi 0, %s34
      %s21 = sphi 0, %s30
      %s22 = sphi 0, %s19
      %s23 = sphi 0, %s20
      %s24 = sphi 0, %s21
      %s25 = sphi 0, %s22
      %s26 = sphi 0, %s23
      %s27 = sphi 0, %s24
      %s43 = sphi 0, %s45
      %s46 = sphi 0, %s43
      %s47 = sphi 0, %s46
      %s63 = sphi 0, %s47
      %s71 = sphi 0, %s73
      %s74 = sphi 0, %s71
      %s75 = sphi 0, %s74
      %s91 = sphi 0, %s75
      %s99 = sphi 0, %s101
      %s102 = sphi 0, %s99
      %s103 = sphi 0, %s102
      %s119 = sphi 0, %s103
      %s127 = sphi 0, %s129
      %s130 = sphi 0, %s127
      %s131 = sphi 0, %s130
      %s147 = sphi 0, %s131
    $region4: #{forward.3} parent=1 // loop_header_branch
      %15 = sbr.rel (%p13) target = $region8
    $region5: #{forward.3} parent=1 // loop_body
      %s17 = ssub.s32 %s12, 1
      %s18 = ssub.s32 %s12, 2
      %s28 = sadd.s32 1, %s21
      %p29 = scmp.ge.s32.totalorder %s28, 1
      %s30 = scalar_select %p29, 0, %s28
      %s31 = sadd.s32 1, %s20
      %s32 = scalar_select %p29, %s31, %s20
      %p33 = scmp.ge.s32.totalorder %s32, 1
      %s34 = scalar_select %p33, 0, %s32
      %s35 = sadd.s32 1, %s19
      %s36 = scalar_select %p33, %s35, %s19
      %p37 = scmp.ge.s32.totalorder %s36, 2
      %s38 = scalar_select %p37, 0, %s36
      %s39 = ssub.s32 %s19, %s38
      %s40 = ssub.s32 %s20, %s34
      %s41 = sor.u32 %s39, %s40
      %p42 = scmp.eq.s32.totalorder %s41, 0
      %s44 = sadd.s32 %s43, 1
      %s45 = scalar_select %p42, %s43, %s44
      %p48 = pneg %p42
      %p49 = scmp.eq.s32.totalorder %s12, 1
      %p50 = por %p48, %p49
      %p51 = scmp.ne.s32.totalorder %s43, %s46
      %p52 = scmp.eq.s32.totalorder %s12, 0
      %p53 = por %p51, %p52
      %p54 = scmp.ne.s32.totalorder %s43, %s46
      %p55 = scmp.eq.s32.totalorder %s17, 1
      %p56 = por %p54, %p55
      %p57 = scmp.ne.s32.totalorder %s46, %s47
      %p58 = scmp.eq.s32.totalorder %s17, 0
      %p59 = por %p57, %p58
      %p60 = scmp.ne.s32.totalorder %s46, %s47
      %p61 = scmp.eq.s32.totalorder %s18, 1
      %p62 = por %p60, %p61
      %p64 = scmp.ne.s32.totalorder %s47, %s63
      %p65 = scmp.eq.s32.totalorder %s18, 0
      %p66 = por %p64, %p65
      %s67 = ssub.s32 %s19, %s38
      %s68 = ssub.s32 %s21, %s30
      %s69 = sor.u32 %s67, %s68
      %p70 = scmp.eq.s32.totalorder %s69, 0
      %s72 = sadd.s32 %s71, 1
      %s73 = scalar_select %p70, %s71, %s72
      %p76 = pneg %p70
      %p77 = scmp.eq.s32.totalorder %s12, 1
      %p78 = por %p76, %p77
      %p79 = scmp.ne.s32.totalorder %s71, %s74
      %p80 = scmp.eq.s32.totalorder %s12, 0
      %p81 = por %p79, %p80
      %p82 = scmp.ne.s32.totalorder %s71, %s74
      %p83 = scmp.eq.s32.totalorder %s17, 1
      %p84 = por %p82, %p83
      %p85 = scmp.ne.s32.totalorder %s74, %s75
      %p86 = scmp.eq.s32.totalorder %s17, 0
      %p87 = por %p85, %p86
      %p88 = scmp.ne.s32.totalorder %s74, %s75
      %p89 = scmp.eq.s32.totalorder %s18, 1
      %p90 = por %p88, %p89
      %p92 = scmp.ne.s32.totalorder %s75, %s91
      %p93 = scmp.eq.s32.totalorder %s18, 0
      %p94 = por %p92, %p93
      %s95 = ssub.s32 %s19, %s38
      %s96 = ssub.s32 %s21, %s30
      %s97 = sor.u32 %s95, %s96
      %p98 = scmp.eq.s32.totalorder %s97, 0
      %s100 = sadd.s32 %s99, 1
      %s101 = scalar_select %p98, %s99, %s100
      %p104 = pneg %p98
      %p105 = scmp.eq.s32.totalorder %s12, 1
      %p106 = por %p104, %p105
      %p107 = scmp.ne.s32.totalorder %s99, %s102
      %p108 = scmp.eq.s32.totalorder %s12, 0
      %p109 = por %p107, %p108
      %p110 = scmp.ne.s32.totalorder %s99, %s102
      %p111 = scmp.eq.s32.totalorder %s17, 1
      %p112 = por %p110, %p111
      %p113 = scmp.ne.s32.totalorder %s102, %s103
      %p114 = scmp.eq.s32.totalorder %s17, 0
      %p115 = por %p113, %p114
      %p116 = scmp.ne.s32.totalorder %s102, %s103
      %p117 = scmp.eq.s32.totalorder %s18, 1
      %p118 = por %p116, %p117
      %p120 = scmp.ne.s32.totalorder %s103, %s119
      %p121 = scmp.eq.s32.totalorder %s18, 0
      %p122 = por %p120, %p121
      %s123 = ssub.s32 %s19, %s38
      %s124 = ssub.s32 %s20, %s34
      %s125 = sor.u32 %s123, %s124
      %p126 = scmp.eq.s32.totalorder %s125, 0
      %s128 = sadd.s32 %s127, 1
      %s129 = scalar_select %p126, %s127, %s128
      %p132 = pneg %p126
      %p133 = scmp.eq.s32.totalorder %s12, 1
      %p134 = por %p132, %p133
      %p135 = scmp.ne.s32.totalorder %s127, %s130
      %p136 = scmp.eq.s32.totalorder %s12, 0
      %p137 = por %p135, %p136
      %p138 = scmp.ne.s32.totalorder %s127, %s130
      %p139 = scmp.eq.s32.totalorder %s17, 1
      %p140 = por %p138, %p139
      %p141 = scmp.ne.s32.totalorder %s130, %s131
      %p142 = scmp.eq.s32.totalorder %s17, 0
      %p143 = por %p141, %p142
      %p144 = scmp.ne.s32.totalorder %s130, %s131
      %p145 = scmp.eq.s32.totalorder %s18, 1
      %p146 = por %p144, %p145
      %p148 = scmp.ne.s32.totalorder %s131, %s147
      %p149 = scmp.eq.s32.totalorder %s18, 0
      %p150 = por %p148, %p149
      %p151 = scmp.le.s32.totalorder 1, %s12
      %p152 = scmp.lt.s32.totalorder %s12, 3
      %p153 = pnand %p151, %p152
      %p154 = pneg %p153
      // Predicated region
      $region9: #{forward.3} parent=5 // pred_check
        _
      $region10: #{forward.3} parent=5 // pred_check_branch
        %156 = sbr.rel (%p153) target = $region12
      $region11: #{forward.3} parent=5 // pred_region
        %s157 = ssub.s32 %s12, 1
      $region12: #{forward.3} parent=5 // pred_fallthru
        _
      %p158 = scmp.lt.s32.totalorder %s12, 2
      // Predicated region
      $region13: #{forward.3} parent=5 // pred_check
        %p159 = pneg %p158
      $region14: #{forward.3} parent=5 // pred_check_branch
        %161 = sbr.rel (%p159) target = $region16
      $region15: #{forward.3} parent=5 // pred_region
        // Predicated region
        $region17: #{forward.3} parent=15 // pred_check
          %p162 = pneg %p53
        $region18: #{forward.3} parent=15 // pred_check_branch
          %164 = sbr.rel (%p162) target = $region20
        $region19: #{forward.3} parent=15 // pred_region
          %p165 = scmp.lt.s32.totalorder %s19, 1
          %s166 = scalar_select %p165, %s19, 1
          %p167 = scmp.lt.s32.totalorder %s20, 0
          %s168 = scalar_select %p167, %s20, 0
          %s169 = sadd.s32 %s168, %s166
          %s170 = smul.addr %s169, 4
          %s171 = scalar_lea.vmem %s0, %s170
        $region20: #{forward.3} parent=15 // pred_fallthru
          _
        // Predicated region
        $region21: #{forward.3} parent=15 // pred_check
          %p172 = pneg %p81
        $region22: #{forward.3} parent=15 // pred_check_branch
          %174 = sbr.rel (%p172) target = $region24
        $region23: #{forward.3} parent=15 // pred_region
          %p175 = scmp.lt.s32.totalorder %s19, 1
          %s176 = scalar_select %p175, %s19, 1
          %p177 = scmp.lt.s32.totalorder %s21, 0
          %s178 = scalar_select %p177, %s21, 0
          %s179 = sadd.s32 %s178, %s176
          %s180 = smul.addr %s179, 4
          %s181 = scalar_lea.vmem %s1, %s180
        $region24: #{forward.3} parent=15 // pred_fallthru
          _
        // Predicated region
        $region25: #{forward.3} parent=15 // pred_check
          %p182 = pneg %p109
        $region26: #{forward.3} parent=15 // pred_check_branch
          %184 = sbr.rel (%p182) target = $region28
        $region27: #{forward.3} parent=15 // pred_region
          %p185 = scmp.lt.s32.totalorder %s19, 1
          %s186 = scalar_select %p185, %s19, 1
          %p187 = scmp.lt.s32.totalorder %s21, 0
          %s188 = scalar_select %p187, %s21, 0
          %s189 = sadd.s32 %s188, %s186
          %s190 = smul.addr %s189, 4
          %s191 = scalar_lea.vmem %s2, %s190
        $region28: #{forward.3} parent=15 // pred_fallthru
          _
      $region16: #{forward.3} parent=5 // pred_fallthru
        _
      %p192 = scmp.le.s32.totalorder 1, %s12
      %p193 = scmp.lt.s32.totalorder %s12, 3
      %p194 = pnand %p192, %p193
      %p195 = pneg %p194
      // Predicated region
      $region29: #{forward.3} parent=5 // pred_check
        _
      $region30: #{forward.3} parent=5 // pred_check_branch
        %197 = sbr.rel (%p194) target = $region32
      $region31: #{forward.3} parent=5 // pred_region
        %s198 = ssub.s32 %s12, 1
        %p199 = scmp.lt.s32.totalorder %s22, 1
        %s200 = scalar_select %p199, %s22, 1
        %p201 = scmp.lt.s32.totalorder %s23, 0
        %s202 = scalar_select %p201, %s23, 0
        %s203 = sadd.s32 %s202, %s200
        %s204 = smul.addr %s203, 4
        %s205 = scalar_lea.vmem %s0, %s204
        %p206 = pneg %p59
        %p207 = pneg %p56
        %p208 = scmp.lt.s32.totalorder %s22, 1
        %s209 = scalar_select %p208, %s22, 1
        %p210 = scmp.lt.s32.totalorder %s24, 0
        %s211 = scalar_select %p210, %s24, 0
        %s212 = sadd.s32 %s211, %s209
        %s213 = smul.addr %s212, 4
        %s214 = scalar_lea.vmem %s1, %s213
        %p215 = pneg %p87
        %p216 = pneg %p84
        %p217 = scmp.lt.s32.totalorder %s22, 1
        %s218 = scalar_select %p217, %s22, 1
        %p219 = scmp.lt.s32.totalorder %s24, 0
        %s220 = scalar_select %p219, %s24, 0
        %s221 = sadd.s32 %s220, %s218
        %s222 = smul.addr %s221, 4
        %s223 = scalar_lea.vmem %s2, %s222
        %p224 = pneg %p115
        %p225 = pneg %p112
        %p226 = pneg %p143
        %p227 = pneg %p140
        %s228 = sand.u32 %s130, 1
        %s229 = scalar_lea.sflag [#allocation6], %s228
        %s230 = sand.u32 %s130, 1
        %s231 = smul.addr %s230, 8
        %s232 = scalar_lea.vmem [#allocation5], %s231
        %p233 = scmp.lt.s32.totalorder %s22, 1
        %s234 = scalar_select %p233, %s22, 1
        %p235 = scmp.lt.s32.totalorder %s23, 0
        %s236 = scalar_select %p235, %s23, 0
        %s237 = sadd.s32 %s236, %s234
        %s238 = smul.addr %s237, 4
        %s239 = scalar_lea.vmem %s0, %s238
        %p240 = scmp.lt.s32.totalorder %s22, 1
        %s241 = scalar_select %p240, %s22, 1
        %p242 = scmp.lt.s32.totalorder %s24, 0
        %s243 = scalar_select %p242, %s24, 0
        %s244 = sadd.s32 %s243, %s241
        %s245 = smul.addr %s244, 4
        %s246 = scalar_lea.vmem %s1, %s245
        %p247 = scmp.lt.s32.totalorder %s22, 1
        %s248 = scalar_select %p247, %s22, 1
        %p249 = scmp.lt.s32.totalorder %s24, 0
        %s250 = scalar_select %p249, %s24, 0
        %s251 = sadd.s32 %s250, %s248
        %s252 = smul.addr %s251, 4
        %s253 = scalar_lea.vmem %s2, %s252
        %p255 = scmp.eq.s32.totalorder %s24, 0
        // Predicated region
        $region33: #{forward.3} parent=31 // pred_check
          %p256 = pneg %p255
        $region34: #{forward.3} parent=31 // pred_check_branch
          %258 = sbr.rel (%p256) target = $region36
        $region35: #{forward.3} parent=31 // pred_region
          %vm259 = vcmask 7168
          %260 = vst.msk [vmem:[#allocation2] sm:$0xff] %vm259, -inf
          %261 = vst.msk [vmem:[#allocation3] sm:$0xff] %vm259, 0.0
          %262 = vst [vmem:[#allocation4] sm:$0xff] 0.0
        $region36: #{forward.3} parent=31 // pred_fallthru
          _
        %v263 = vld [vmem:[%s239] sm:$0xf]
        %v264 = vld [vmem:[%s246] sm:$0xf]
        %v265 = vld [vmem:[%s253] sm:$0xf]
        %266 = vmatprep.subr.bf16.mxu0 0
        %267 = vmatpush1.bf16.xpose.msra.mxu0 %v264
        %268 = vmatprep.subr.bf16.mxu0 0
        %269 = vmatpush1.bf16.xpose.msra.mxu0 0
        %270 = vmatprep.subr.bf16.mxu0 0
        %271 = vmatpush1.bf16.xpose.msra.mxu0 0
        %272 = vmatprep.subr.bf16.mxu0 0
        %273 = vmatpush1.bf16.xpose.msra.mxu0 0
        %274 = vmatprep.subr.bf16.mxu0 0
        %275 = vmatpush1.bf16.xpose.msra.mxu0 0
        %276 = vmatprep.subr.bf16.mxu0 0
        %277 = vmatpush1.bf16.xpose.msra.mxu0 0
        %278 = vmatprep.subr.bf16.mxu0 0
        %279 = vmatpush1.bf16.xpose.msra.mxu0 0
        %280 = vmatprep.subr.bf16.mxu0 0
        %281 = vmatpush1.bf16.xpose.msra.mxu0 0
        %282 = vmatprep.subr.bf16.mxu0 0
        %283 = vmatpush1.bf16.xpose.msra.mxu0 0
        %284 = vmatprep.subr.bf16.mxu0 0
        %285 = vmatpush1.bf16.xpose.msra.mxu0 0
        %286 = vmatprep.subr.bf16.mxu0 0
        %287 = vmatpush1.bf16.xpose.msra.mxu0 0
        %288 = vmatprep.subr.bf16.mxu0 0
        %289 = vmatpush1.bf16.xpose.msra.mxu0 0
        %290 = vmatprep.subr.bf16.mxu0 0
        %291 = vmatpush1.bf16.xpose.msra.mxu0 0
        %292 = vmatprep.subr.bf16.mxu0 0
        %293 = vmatpush1.bf16.xpose.msra.mxu0 0
        %294 = vmatprep.subr.bf16.mxu0 0
        %295 = vmatpush1.bf16.xpose.msra.mxu0 0
        %296 = vmatprep.subr.bf16.mxu0 0
        %297 = vmatpush1.bf16.xpose.msra.mxu0 0
        %298 = vmatprep.mubr.bf16.mxu0 0
        %299 = vmatmul.mubr.bf16.gmra.mrb[0].mxu0 %v263
        %v300 = vpop.f32.mrb[0].mxu0
        %v301 = vadd.f32 0.0, %v300
        %v302 = vpop.f32.mrb[0].mxu0
        %v303 = vpop.f32.mrb[0].mxu0
        %v304 = vpop.f32.mrb[0].mxu0
        %305 = vdwg.mxu0
        %v306 = vld [vmem:[#allocation2] sm:$0xff]
        %vm307 = vcmask 64512
        %v308 = vsel %vm307, %v301, -inf
        %309 = vmax.xlane.f32.xlu0 %v308
        %v310 = vpop.xlane.xlu0 %309
        %v311 = vmax.f32 %v306, %v310
        %v312 = vsub.f32 %v306, %v311
        %v313 = vmul.f32 %v312, 1.442695
        %v314 = vpow.pop %v313
        %316 = vset.pattern.permute.xlu0 0
        %317 = vperm.xlu0 %316, %v311
        %v318 = vpop.permute.xlu0 %317
        %v320 = vsub.f32 %v301, %v318
        %v321 = vmul.f32 %v320, 1.442695
        %v322 = vpow.pop %v321
        %v323 = vld [vmem:[#allocation3] sm:$0xff]
        %v324 = vmul.f32 %v314, %v323
        %v325 = vsel %vm307, %v322, 0.0
        %326 = vadd.xlane.f32.xlu0 %v325
        %v327 = vpop.xlane.xlu0 %326
        %v328 = vadd.f32 %v324, %v327
        %vm329 = vcmask 7168
        %330 = vst.msk [vmem:[#allocation3] sm:$0xff] %vm329, %v328
        %v331 = vld [vmem:[#allocation4] sm:$0xff]
        %333 = vset.pattern.permute.xlu0 0
        %334 = vperm.xlu0 %333, %v314
        %v335 = vpop.permute.xlu0 %334
        %v337 = vmul.f32 %v335, %v331
        %v338 = vpack.c.bf16 %v322, %v322
        %v340 = vsel %vm307, %v338, 0
        %vm342 = vcmask 1043456
        %v344 = vsel %vm342, %v265, 0
        %346 = vmatprep.subr.bf16.mxu0 0
        %347 = vmatpush1.bf16.msra.mxu0 %v344
        %348 = vmatprep.subr.bf16.mxu0 0
        %349 = vmatpush1.bf16.msra.mxu0 0
        %350 = vmatprep.subr.bf16.mxu0 0
        %351 = vmatpush1.bf16.msra.mxu0 0
        %352 = vmatprep.subr.bf16.mxu0 0
        %353 = vmatpush1.bf16.msra.mxu0 0
        %354 = vmatprep.subr.bf16.mxu0 0
        %355 = vmatpush1.bf16.msra.mxu0 0
        %356 = vmatprep.subr.bf16.mxu0 0
        %357 = vmatpush1.bf16.msra.mxu0 0
        %358 = vmatprep.subr.bf16.mxu0 0
        %359 = vmatpush1.bf16.msra.mxu0 0
        %360 = vmatprep.subr.bf16.mxu0 0
        %361 = vmatpush1.bf16.msra.mxu0 0
        %362 = vmatprep.subr.bf16.mxu0 0
        %363 = vmatpush1.bf16.msra.mxu0 0
        %364 = vmatprep.subr.bf16.mxu0 0
        %365 = vmatpush1.bf16.msra.mxu0 0
        %366 = vmatprep.subr.bf16.mxu0 0
        %367 = vmatpush1.bf16.msra.mxu0 0
        %368 = vmatprep.subr.bf16.mxu0 0
        %369 = vmatpush1.bf16.msra.mxu0 0
        %370 = vmatprep.subr.bf16.mxu0 0
        %371 = vmatpush1.bf16.msra.mxu0 0
        %372 = vmatprep.subr.bf16.mxu0 0
        %373 = vmatpush1.bf16.msra.mxu0 0
        %374 = vmatprep.subr.bf16.mxu0 0
        %375 = vmatpush1.bf16.msra.mxu0 0
        %376 = vmatprep.subr.bf16.mxu0 0
        %377 = vmatpush1.bf16.msra.mxu0 0
        %378 = vmatprep.mubr.bf16.mxu0 0
        %379 = vmatmul.mubr.bf16.gmra.mrb[0].mxu0 %v340
        %v380 = vpop.f32.mrb[0].mxu0
        %v381 = vadd.f32 0.0, %v380
        %v382 = vpop.f32.mrb[0].mxu0
        %v383 = vpop.f32.mrb[0].mxu0
        %v384 = vpop.f32.mrb[0].mxu0
        %385 = vdwg.mxu0
        %v386 = vadd.f32 %v337, %v381
        %387 = vst [vmem:[#allocation4] sm:$0xff] %v386
        %388 = vst.msk [vmem:[#allocation2] sm:$0xff] %vm329, %v311
        // Predicated region
        $region37: #{forward.3} parent=31 // pred_check
          %p389 = pneg %p255
        $region38: #{forward.3} parent=31 // pred_check_branch
          %391 = sbr.rel (%p389) target = $region40
        $region39: #{forward.3} parent=31 // pred_region
          %v392 = vld [vmem:[#allocation3] sm:$0xff]
          %v393 = vrcp.pop %v392
          %v394 = vld [vmem:[#allocation4] sm:$0xff]
          %396 = vset.pattern.permute.xlu0 0
          %397 = vperm.xlu0 %396, %v393
          %v398 = vpop.permute.xlu0 %397
          %v400 = vmul.f32 %v394, %v398
          %401 = vst [vmem:[%s232] sm:$0xff] %v400
        $region40: #{forward.3} parent=31 // pred_fallthru
          _
        %s402 = sand.u32 %s130, 1
        %s403 = scalar_lea.sflag [#allocation6], %s402
        %s404 = sand.u32 %s130, 1
        %s405 = smul.addr %s404, 8
        %s406 = scalar_lea.vmem [#allocation5], %s405
        // Predicated region
        $region41: #{forward.3} parent=31 // pred_check
          %p407 = pneg %p140
        $region42: #{forward.3} parent=31 // pred_check_branch
          %409 = sbr.rel (%p407) target = $region44
        $region43: #{forward.3} parent=31 // pred_region
          %s411 = ssub.s32 128, 128
          %412 = vsyncadd %s403, %s411
          %s413 = sadd.s32 %s23, %s22
          %s414 = smul.addr %s413, 128
          %s415 = scalar_lea.hbm %s3, %s414
          %s417 = sshll.u32 %s406, 4
          %s418 = int_to_ptr.vmem [resolvable:$true] %s417
          %420 = dma.vmem_to_hbm [thread:$0]  %s418, 128, %s415, %s403
        $region44: #{forward.3} parent=31 // pred_fallthru
          _
      $region32: #{forward.3} parent=5 // pred_fallthru
        _
      %p421 = scmp.le.s32.totalorder 2, %s12
      // Predicated region
      $region45: #{forward.3} parent=5 // pred_check
        %p422 = pneg %p421
      $region46: #{forward.3} parent=5 // pred_check_branch
        %424 = sbr.rel (%p422) target = $region48
      $region47: #{forward.3} parent=5 // pred_region
        %s425 = ssub.s32 %s12, 2
        // Predicated region
        $region49: #{forward.3} parent=47 // pred_check
          %p426 = pneg %p146
        $region50: #{forward.3} parent=47 // pred_check_branch
          %428 = sbr.rel (%p426) target = $region52
        $region51: #{forward.3} parent=47 // pred_region
          %s429 = sand.u32 %s131, 1
          %s430 = scalar_lea.sflag [#allocation6], %s429
          %s431 = sand.u32 %s131, 1
          %s432 = smul.addr %s431, 8
          %s433 = scalar_lea.vmem [#allocation5], %s432
          %434 = dma.done %s430, 128
        $region52: #{forward.3} parent=47 // pred_fallthru
          _
      $region48: #{forward.3} parent=5 // pred_fallthru
        _
    $region6: #{forward.3} parent=1 // loop_footer
      %s16 = sadd.s32 1, %s12
    $region7: #{forward.3} parent=1 // loop_footer_branch
      %11 = sbr.rel target = $region3
    $region8: #{forward.3} parent=1 // loop_exit
      _
    %435 = vsyncpa [#allocation6], 1
    %s436 = scalar_lea.sflag [#allocation6], 1
    %437 = vsyncpa %s436, 1

// kernel: forward.2
$region0: #{forward.2}
  #allocation0 [shape = 'u32[]', space=smem, size = 0x4, offset = 0x4, fixed_abs, tag = 'smem constant byte address 0x4 - core index']
  #allocation1 [shape = 'u32[144,128]{1,0:T(1,128)}', space=vmem, size = 0x12000, scoped, tag = 'internal scratch']
  %s0 = inlined_call_operand.vmem [shape: bf16[2,8,32], index: 0, kind: input, shape index: {}]
  %s1 = inlined_call_operand.hbm [shape: bf16[384,32], index: 1, kind: input, shape index: {}]
  %s2 = inlined_call_operand.vmem [shape: bf16[2,8,128], index: 2, kind: output, shape index: {0}]
  %s3 = inlined_call_operand.vmem [shape: bf16[2,8,128], index: 3, kind: output, shape index: {1}]
  %s4 = inlined_call_operand.vmem [shape: bf16[2,8,128], index: 4, kind: output, shape index: {2}]
  %5 = xla_tuple %s2, %s3, %s4
  %s6 = sld [smem:[#allocation0]]
  $region61: #{forward.2} parent=0
    _
  %s8 = ssub.s32 1, %s6
  %s9 = scalar_select 0, %s8, %s6
  $region1: #{forward.2} parent=0
    #allocation2 [shape = 'u8[98304]{0}', space=vmem, size = 0x18000, scoped, tag = 'input window, operand 1, single buffered']
    #allocation3 [shape = 's32[2]{0}', space=sflag, size = 0x8, scoped, tag = 'scoped memory for forward.2']
    %10 = vsyncpa [#allocation3], 0
    loop: start=0, step=1, limit=4
    $region2: #{forward.2} parent=1 // loop_pre_header
      _
    $region3: #{forward.2} parent=1 // loop_header
      %s12 = sphi 0, %s16
      %p13 = scmp.ge.s32.totalorder %s12, 4
      %s19 = sphi 0, %s31
      %s20 = sphi 0, %s27
      %s21 = sphi 0, %s19
      %s22 = sphi 0, %s20
      %s23 = sphi 0, %s21
      %s24 = sphi 0, %s22
      %s36 = sphi 0, %s38
      %s39 = sphi 0, %s36
      %s40 = sphi 0, %s39
      %s56 = sphi 0, %s40
      %s60 = sphi 0, %s60
      %s62 = sphi 0, %s60
      %s63 = sphi 0, %s62
      %s77 = sphi 0, %s63
      %s85 = sphi 0, %s87
      %s88 = sphi 0, %s85
      %s89 = sphi 0, %s88
      %s105 = sphi 0, %s89
      %s113 = sphi 0, %s115
      %s116 = sphi 0, %s113
      %s117 = sphi 0, %s116
      %s133 = sphi 0, %s117
      %s141 = sphi 0, %s143
      %s144 = sphi 0, %s141
      %s145 = sphi 0, %s144
      %s161 = sphi 0, %s145
    $region4: #{forward.2} parent=1 // loop_header_branch
      %15 = sbr.rel (%p13) target = $region8
    $region5: #{forward.2} parent=1 // loop_body
      %s17 = ssub.s32 %s12, 1
      %s18 = ssub.s32 %s12, 2
      %s25 = sadd.s32 1, %s20
      %p26 = scmp.ge.s32.totalorder %s25, 1
      %s27 = scalar_select %p26, 0, %s25
      %s28 = sadd.s32 1, %s19
      %s29 = scalar_select %p26, %s28, %s19
      %p30 = scmp.ge.s32.totalorder %s29, 2
      %s31 = scalar_select %p30, 0, %s29
      %s32 = ssub.s32 %s19, %s31
      %s33 = ssub.s32 %s20, %s27
      %s34 = sor.u32 %s32, %s33
      %p35 = scmp.eq.s32.totalorder %s34, 0
      %s37 = sadd.s32 %s36, 1
      %s38 = scalar_select %p35, %s36, %s37
      %p41 = pneg %p35
      %p42 = scmp.eq.s32.totalorder %s12, 1
      %p43 = por %p41, %p42
      %p44 = scmp.ne.s32.totalorder %s36, %s39
      %p45 = scmp.eq.s32.totalorder %s12, 0
      %p46 = por %p44, %p45
      %p47 = scmp.ne.s32.totalorder %s36, %s39
      %p48 = scmp.eq.s32.totalorder %s17, 1
      %p49 = por %p47, %p48
      %p50 = scmp.ne.s32.totalorder %s39, %s40
      %p51 = scmp.eq.s32.totalorder %s17, 0
      %p52 = por %p50, %p51
      %p53 = scmp.ne.s32.totalorder %s39, %s40
      %p54 = scmp.eq.s32.totalorder %s18, 1
      %p55 = por %p53, %p54
      %p57 = scmp.ne.s32.totalorder %s40, %s56
      %p58 = scmp.eq.s32.totalorder %s18, 0
      %p59 = por %p57, %p58
      %s61 = sadd.s32 %s60, 1
      %p64 = scmp.eq.s32.totalorder %s12, 1
      %p65 = scmp.ne.s32.totalorder %s60, %s62
      %p66 = scmp.eq.s32.totalorder %s12, 0
      %p67 = por %p65, %p66
      %p68 = scmp.ne.s32.totalorder %s60, %s62
      %p69 = scmp.eq.s32.totalorder %s17, 1
      %p70 = por %p68, %p69
      %p71 = scmp.ne.s32.totalorder %s62, %s63
      %p72 = scmp.eq.s32.totalorder %s17, 0
      %p73 = por %p71, %p72
      %p74 = scmp.ne.s32.totalorder %s62, %s63
      %p75 = scmp.eq.s32.totalorder %s18, 1
      %p76 = por %p74, %p75
      %p78 = scmp.ne.s32.totalorder %s63, %s77
      %p79 = scmp.eq.s32.totalorder %s18, 0
      %p80 = por %p78, %p79
      %s81 = ssub.s32 %s19, %s31
      %s82 = ssub.s32 %s20, %s27
      %s83 = sor.u32 %s81, %s82
      %p84 = scmp.eq.s32.totalorder %s83, 0
      %s86 = sadd.s32 %s85, 1
      %s87 = scalar_select %p84, %s85, %s86
      %p90 = pneg %p84
      %p91 = scmp.eq.s32.totalorder %s12, 1
      %p92 = por %p90, %p91
      %p93 = scmp.ne.s32.totalorder %s85, %s88
      %p94 = scmp.eq.s32.totalorder %s12, 0
      %p95 = por %p93, %p94
      %p96 = scmp.ne.s32.totalorder %s85, %s88
      %p97 = scmp.eq.s32.totalorder %s17, 1
      %p98 = por %p96, %p97
      %p99 = scmp.ne.s32.totalorder %s88, %s89
      %p100 = scmp.eq.s32.totalorder %s17, 0
      %p101 = por %p99, %p100
      %p102 = scmp.ne.s32.totalorder %s88, %s89
      %p103 = scmp.eq.s32.totalorder %s18, 1
      %p104 = por %p102, %p103
      %p106 = scmp.ne.s32.totalorder %s89, %s105
      %p107 = scmp.eq.s32.totalorder %s18, 0
      %p108 = por %p106, %p107
      %s109 = ssub.s32 %s19, %s31
      %s110 = ssub.s32 %s20, %s27
      %s111 = sor.u32 %s109, %s110
      %p112 = scmp.eq.s32.totalorder %s111, 0
      %s114 = sadd.s32 %s113, 1
      %s115 = scalar_select %p112, %s113, %s114
      %p118 = pneg %p112
      %p119 = scmp.eq.s32.totalorder %s12, 1
      %p120 = por %p118, %p119
      %p121 = scmp.ne.s32.totalorder %s113, %s116
      %p122 = scmp.eq.s32.totalorder %s12, 0
      %p123 = por %p121, %p122
      %p124 = scmp.ne.s32.totalorder %s113, %s116
      %p125 = scmp.eq.s32.totalorder %s17, 1
      %p126 = por %p124, %p125
      %p127 = scmp.ne.s32.totalorder %s116, %s117
      %p128 = scmp.eq.s32.totalorder %s17, 0
      %p129 = por %p127, %p128
      %p130 = scmp.ne.s32.totalorder %s116, %s117
      %p131 = scmp.eq.s32.totalorder %s18, 1
      %p132 = por %p130, %p131
      %p134 = scmp.ne.s32.totalorder %s117, %s133
      %p135 = scmp.eq.s32.totalorder %s18, 0
      %p136 = por %p134, %p135
      %s137 = ssub.s32 %s19, %s31
      %s138 = ssub.s32 %s20, %s27
      %s139 = sor.u32 %s137, %s138
      %p140 = scmp.eq.s32.totalorder %s139, 0
      %s142 = sadd.s32 %s141, 1
      %s143 = scalar_select %p140, %s141, %s142
      %p146 = pneg %p140
      %p147 = scmp.eq.s32.totalorder %s12, 1
      %p148 = por %p146, %p147
      %p149 = scmp.ne.s32.totalorder %s141, %s144
      %p150 = scmp.eq.s32.totalorder %s12, 0
      %p151 = por %p149, %p150
      %p152 = scmp.ne.s32.totalorder %s141, %s144
      %p153 = scmp.eq.s32.totalorder %s17, 1
      %p154 = por %p152, %p153
      %p155 = scmp.ne.s32.totalorder %s144, %s145
      %p156 = scmp.eq.s32.totalorder %s17, 0
      %p157 = por %p155, %p156
      %p158 = scmp.ne.s32.totalorder %s144, %s145
      %p159 = scmp.eq.s32.totalorder %s18, 1
      %p160 = por %p158, %p159
      %p162 = scmp.ne.s32.totalorder %s145, %s161
      %p163 = scmp.eq.s32.totalorder %s18, 0
      %p164 = por %p162, %p163
      %p165 = scmp.le.s32.totalorder 1, %s12
      %p166 = scmp.lt.s32.totalorder %s12, 3
      %p167 = pnand %p165, %p166
      %p168 = pneg %p167
      // Predicated region
      $region9: #{forward.2} parent=5 // pred_check
        _
      $region10: #{forward.2} parent=5 // pred_check_branch
        %170 = sbr.rel (%p167) target = $region12
      $region11: #{forward.2} parent=5 // pred_region
        %s171 = ssub.s32 %s12, 1
        // Predicated region
        $region13: #{forward.2} parent=11 // pred_check
          %p172 = pneg %p73
        $region14: #{forward.2} parent=11 // pred_check_branch
          %174 = sbr.rel (%p172) target = $region16
        $region15: #{forward.2} parent=11 // pred_region
          %s176 = ssub.s32 3072, 3072
          %177 = vsyncadd [#allocation3], %s176
          %s178 = sshll.u32 [#allocation2], 4
          %s179 = int_to_ptr.vmem [resolvable:$true] %s178
          %184 = dma.hbm_to_vmem [thread:$0]  %s1, 3072, %s179, [#allocation3], 64, 64, 4
        $region16: #{forward.2} parent=11 // pred_fallthru
          _
      $region12: #{forward.2} parent=5 // pred_fallthru
        _
      %p185 = scmp.lt.s32.totalorder %s12, 2
      // Predicated region
      $region17: #{forward.2} parent=5 // pred_check
        %p186 = pneg %p185
      $region18: #{forward.2} parent=5 // pred_check_branch
        %188 = sbr.rel (%p186) target = $region20
      $region19: #{forward.2} parent=5 // pred_region
        // Predicated region
        $region21: #{forward.2} parent=19 // pred_check
          %p189 = pneg %p46
        $region22: #{forward.2} parent=19 // pred_check_branch
          %191 = sbr.rel (%p189) target = $region24
        $region23: #{forward.2} parent=19 // pred_region
          %p192 = scmp.lt.s32.totalorder %s19, 1
          %s193 = scalar_select %p192, %s19, 1
          %p194 = scmp.lt.s32.totalorder %s20, 0
          %s195 = scalar_select %p194, %s20, 0
          %s196 = sadd.s32 %s195, %s193
          %s197 = smul.addr %s196, 4
          %s198 = scalar_lea.vmem %s0, %s197
        $region24: #{forward.2} parent=19 // pred_fallthru
          _
      $region20: #{forward.2} parent=5 // pred_fallthru
        _
      %p199 = scmp.le.s32.totalorder 1, %s12
      %p200 = scmp.lt.s32.totalorder %s12, 3
      %p201 = pnand %p199, %p200
      %p202 = pneg %p201
      // Predicated region
      $region25: #{forward.2} parent=5 // pred_check
        _
      $region26: #{forward.2} parent=5 // pred_check_branch
        %204 = sbr.rel (%p201) target = $region28
      $region27: #{forward.2} parent=5 // pred_region
        %s205 = ssub.s32 %s12, 1
        // Predicated region
        $region29: #{forward.2} parent=27 // pred_check
          %p206 = pneg %p73
        $region30: #{forward.2} parent=27 // pred_check_branch
          %208 = sbr.rel (%p206) target = $region32
        $region31: #{forward.2} parent=27 // pred_region
          %209 = dma.done [#allocation3], 3072
        $region32: #{forward.2} parent=27 // pred_fallthru
          _
        %p210 = scmp.lt.s32.totalorder %s21, 1
        %s211 = scalar_select %p210, %s21, 1
        %p212 = scmp.lt.s32.totalorder %s22, 0
        %s213 = scalar_select %p212, %s22, 0
        %s214 = sadd.s32 %s213, %s211
        %s215 = smul.addr %s214, 4
        %s216 = scalar_lea.vmem %s0, %s215
        %p217 = pneg %p52
        %p218 = pneg %p49
        %p219 = pneg %p73
        %p220 = pneg %p70
        %p221 = pneg %p101
        %p222 = pneg %p98
        %p223 = scmp.lt.s32.totalorder %s21, 1
        %s224 = scalar_select %p223, %s21, 1
        %p225 = scmp.lt.s32.totalorder %s22, 0
        %s226 = scalar_select %p225, %s22, 0
        %s227 = sadd.s32 %s226, %s224
        %s228 = smul.addr %s227, 4
        %s229 = scalar_lea.vmem %s2, %s228
        %p230 = pneg %p129
        %p231 = pneg %p126
        %p232 = scmp.lt.s32.totalorder %s21, 1
        %s233 = scalar_select %p232, %s21, 1
        %p234 = scmp.lt.s32.totalorder %s22, 0
        %s235 = scalar_select %p234, %s22, 0
        %s236 = sadd.s32 %s235, %s233
        %s237 = smul.addr %s236, 4
        %s238 = scalar_lea.vmem %s3, %s237
        %p239 = pneg %p157
        %p240 = pneg %p154
        %p241 = scmp.lt.s32.totalorder %s21, 1
        %s242 = scalar_select %p241, %s21, 1
        %p243 = scmp.lt.s32.totalorder %s22, 0
        %s244 = scalar_select %p243, %s22, 0
        %s245 = sadd.s32 %s244, %s242
        %s246 = smul.addr %s245, 4
        %s247 = scalar_lea.vmem %s4, %s246
        %p248 = scmp.lt.s32.totalorder %s21, 1
        %s249 = scalar_select %p248, %s21, 1
        %p250 = scmp.lt.s32.totalorder %s22, 0
        %s251 = scalar_select %p250, %s22, 0
        %s252 = sadd.s32 %s251, %s249
        %s253 = smul.addr %s252, 4
        %s254 = scalar_lea.vmem %s0, %s253
        %p255 = scmp.lt.s32.totalorder %s21, 1
        %s256 = scalar_select %p255, %s21, 1
        %p257 = scmp.lt.s32.totalorder %s22, 0
        %s258 = scalar_select %p257, %s22, 0
        %s259 = sadd.s32 %s258, %s256
        %s260 = smul.addr %s259, 4
        %s261 = scalar_lea.vmem %s2, %s260
        %p262 = scmp.lt.s32.totalorder %s21, 1
        %s263 = scalar_select %p262, %s21, 1
        %p264 = scmp.lt.s32.totalorder %s22, 0
        %s265 = scalar_select %p264, %s22, 0
        %s266 = sadd.s32 %s265, %s263
        %s267 = smul.addr %s266, 4
        %s268 = scalar_lea.vmem %s3, %s267
        %p269 = scmp.lt.s32.totalorder %s21, 1
        %s270 = scalar_select %p269, %s21, 1
        %p271 = scmp.lt.s32.totalorder %s22, 0
        %s272 = scalar_select %p271, %s22, 0
        %s273 = sadd.s32 %s272, %s270
        %s274 = smul.addr %s273, 4
        %s275 = scalar_lea.vmem %s4, %s274
        %v277 = vld [vmem:[%s254] sm:$0xf]
        %v278 = vld [vmem:[#allocation2] sm:$0xf]
        %v279 = vld [vmem:[#allocation2 + $0x4] sm:$0xf]
        %v280 = vld [vmem:[#allocation2 + $0x8] sm:$0xf]
        %v281 = vld [vmem:[#allocation2 + $0xc] sm:$0xf]
        %v282 = vld [vmem:[#allocation2 + $0x10] sm:$0xf]
        %v283 = vld [vmem:[#allocation2 + $0x14] sm:$0xf]
        %v284 = vld [vmem:[#allocation2 + $0x18] sm:$0xf]
        %v285 = vld [vmem:[#allocation2 + $0x1c] sm:$0xf]
        %v286 = vld [vmem:[#allocation2 + $0x20] sm:$0xf]
        %v287 = vld [vmem:[#allocation2 + $0x24] sm:$0xf]
        %v288 = vld [vmem:[#allocation2 + $0x28] sm:$0xf]
        %v289 = vld [vmem:[#allocation2 + $0x2c] sm:$0xf]
        %v290 = vld [vmem:[#allocation2 + $0x30] sm:$0xf]
        %v291 = vld [vmem:[#allocation2 + $0x34] sm:$0xf]
        %v292 = vld [vmem:[#allocation2 + $0x38] sm:$0xf]
        %v293 = vld [vmem:[#allocation2 + $0x3c] sm:$0xf]
        %v294 = vld [vmem:[#allocation2 + $0x40] sm:$0xf]
        %v295 = vld [vmem:[#allocation2 + $0x44] sm:$0xf]
        %v296 = vld [vmem:[#allocation2 + $0x48] sm:$0xf]
        %v297 = vld [vmem:[#allocation2 + $0x4c] sm:$0xf]
        %v298 = vld [vmem:[#allocation2 + $0x50] sm:$0xf]
        %v299 = vld [vmem:[#allocation2 + $0x54] sm:$0xf]
        %v300 = vld [vmem:[#allocation2 + $0x58] sm:$0xf]
        %v301 = vld [vmem:[#allocation2 + $0x5c] sm:$0xf]
        %v302 = vld [vmem:[#allocation2 + $0x60] sm:$0xf]
        %v303 = vld [vmem:[#allocation2 + $0x64] sm:$0xf]
        %v304 = vld [vmem:[#allocation2 + $0x68] sm:$0xf]
        %v305 = vld [vmem:[#allocation2 + $0x6c] sm:$0xf]
        %v306 = vld [vmem:[#allocation2 + $0x70] sm:$0xf]
        %v307 = vld [vmem:[#allocation2 + $0x74] sm:$0xf]
        %v308 = vld [vmem:[#allocation2 + $0x78] sm:$0xf]
        %v309 = vld [vmem:[#allocation2 + $0x7c] sm:$0xf]
        %v310 = vld [vmem:[#allocation2 + $0x80] sm:$0xf]
        %v311 = vld [vmem:[#allocation2 + $0x84] sm:$0xf]
        %v312 = vld [vmem:[#allocation2 + $0x88] sm:$0xf]
        %v313 = vld [vmem:[#allocation2 + $0x8c] sm:$0xf]
        %v314 = vld [vmem:[#allocation2 + $0x90] sm:$0xf]
        %v315 = vld [vmem:[#allocation2 + $0x94] sm:$0xf]
        %v316 = vld [vmem:[#allocation2 + $0x98] sm:$0xf]
        %v317 = vld [vmem:[#allocation2 + $0x9c] sm:$0xf]
        %v318 = vld [vmem:[#allocation2 + $0xa0] sm:$0xf]
        %v319 = vld [vmem:[#allocation2 + $0xa4] sm:$0xf]
        %v320 = vld [vmem:[#allocation2 + $0xa8] sm:$0xf]
        %v321 = vld [vmem:[#allocation2 + $0xac] sm:$0xf]
        %v322 = vld [vmem:[#allocation2 + $0xb0] sm:$0xf]
        %v323 = vld [vmem:[#allocation2 + $0xb4] sm:$0xf]
        %v324 = vld [vmem:[#allocation2 + $0xb8] sm:$0xf]
        %v325 = vld [vmem:[#allocation2 + $0xbc] sm:$0xf]
        %v374 = vunpack.c.l.b16 %v278
        %v375 = vunpack.c.l.b16 %v279
        %v376 = vunpack.c.l.b16 %v280
        %v377 = vunpack.c.l.b16 %v281
        %v378 = vunpack.c.l.b16 %v282
        %v379 = vunpack.c.l.b16 %v283
        %v380 = vunpack.c.l.b16 %v284
        %v381 = vunpack.c.l.b16 %v285
        %v382 = vunpack.c.l.b16 %v286
        %v383 = vunpack.c.l.b16 %v287
        %v384 = vunpack.c.l.b16 %v288
        %v385 = vunpack.c.l.b16 %v289
        %v386 = vunpack.c.l.b16 %v290
        %v387 = vunpack.c.l.b16 %v291
        %v388 = vunpack.c.l.b16 %v292
        %v389 = vunpack.c.l.b16 %v293
        %v390 = vunpack.c.l.b16 %v294
        %v391 = vunpack.c.l.b16 %v295
        %v392 = vunpack.c.l.b16 %v296
        %v393 = vunpack.c.l.b16 %v297
        %v394 = vunpack.c.l.b16 %v298
        %v395 = vunpack.c.l.b16 %v299
        %v396 = vunpack.c.l.b16 %v300
        %v397 = vunpack.c.l.b16 %v301
        %v398 = vunpack.c.l.b16 %v302
        %v399 = vunpack.c.l.b16 %v303
        %v400 = vunpack.c.l.b16 %v304
        %v401 = vunpack.c.l.b16 %v305
        %v402 = vunpack.c.l.b16 %v306
        %v403 = vunpack.c.l.b16 %v307
        %v404 = vunpack.c.l.b16 %v308
        %v405 = vunpack.c.l.b16 %v309
        %v406 = vunpack.c.l.b16 %v310
        %v407 = vunpack.c.l.b16 %v311
        %v408 = vunpack.c.l.b16 %v312
        %v409 = vunpack.c.l.b16 %v313
        %v410 = vunpack.c.l.b16 %v314
        %v411 = vunpack.c.l.b16 %v315
        %v412 = vunpack.c.l.b16 %v316
        %v413 = vunpack.c.l.b16 %v317
        %v414 = vunpack.c.l.b16 %v318
        %v415 = vunpack.c.l.b16 %v319
        %v416 = vunpack.c.l.b16 %v320
        %v417 = vunpack.c.l.b16 %v321
        %v418 = vunpack.c.l.b16 %v322
        %v419 = vunpack.c.l.b16 %v323
        %v420 = vunpack.c.l.b16 %v324
        %v421 = vunpack.c.l.b16 %v325
        %v422 = vpack.c.b16 %v375, %v374
        %v423 = vpack.c.b16 %v377, %v376
        %v424 = vpack.c.b16 %v379, %v378
        %v425 = vpack.c.b16 %v381, %v380
        %v426 = vpack.c.b16 %v383, %v382
        %v427 = vpack.c.b16 %v385, %v384
        %v428 = vpack.c.b16 %v387, %v386
        %v429 = vpack.c.b16 %v389, %v388
        %v430 = vpack.c.b16 %v391, %v390
        %v431 = vpack.c.b16 %v393, %v392
        %v432 = vpack.c.b16 %v395, %v394
        %v433 = vpack.c.b16 %v397, %v396
        %v434 = vpack.c.b16 %v399, %v398
        %v435 = vpack.c.b16 %v401, %v400
        %v436 = vpack.c.b16 %v403, %v402
        %v437 = vpack.c.b16 %v405, %v404
        %v438 = vpack.c.b16 %v407, %v406
        %v439 = vpack.c.b16 %v409, %v408
        %v440 = vpack.c.b16 %v411, %v410
        %v441 = vpack.c.b16 %v413, %v412
        %v442 = vpack.c.b16 %v415, %v414
        %v443 = vpack.c.b16 %v417, %v416
        %v444 = vpack.c.b16 %v419, %v418
        %v445 = vpack.c.b16 %v421, %v420
        %vm446 = vcmask 261120
        %v448 = vsel %vm446, %v277, 0
        %v451 = vsel %vm446, %v422, 0
        %v454 = vsel %vm446, %v423, 0
        %v457 = vsel %vm446, %v424, 0
        %v460 = vsel %vm446, %v425, 0
        %v463 = vsel %vm446, %v426, 0
        %v466 = vsel %vm446, %v427, 0
        %v469 = vsel %vm446, %v428, 0
        %v472 = vsel %vm446, %v429, 0
        %v475 = vsel %vm446, %v430, 0
        %v478 = vsel %vm446, %v431, 0
        %v481 = vsel %vm446, %v432, 0
        %v484 = vsel %vm446, %v433, 0
        %v487 = vsel %vm446, %v434, 0
        %v490 = vsel %vm446, %v435, 0
        %v493 = vsel %vm446, %v436, 0
        %v496 = vsel %vm446, %v437, 0
        %v499 = vsel %vm446, %v438, 0
        %v502 = vsel %vm446, %v439, 0
        %v505 = vsel %vm446, %v440, 0
        %v508 = vsel %vm446, %v441, 0
        %v511 = vsel %vm446, %v442, 0
        %v514 = vsel %vm446, %v443, 0
        %v517 = vsel %vm446, %v444, 0
        %v520 = vsel %vm446, %v445, 0
        %522 = vmatprep.subr.bf16.mxu0 0
        %523 = vmatpush1.bf16.xpose.msra.mxu0 %v451
        %524 = vmatprep.subr.bf16.mxu0 0
        %525 = vmatpush1.bf16.xpose.msra.mxu0 %v454
        %526 = vmatprep.subr.bf16.mxu0 0
        %527 = vmatpush1.bf16.xpose.msra.mxu0 %v457
        %528 = vmatprep.subr.bf16.mxu0 0
        %529 = vmatpush1.bf16.xpose.msra.mxu0 %v460
        %530 = vmatprep.subr.bf16.mxu0 0
        %531 = vmatpush1.bf16.xpose.msra.mxu0 %v463
        %532 = vmatprep.subr.bf16.mxu0 0
        %533 = vmatpush1.bf16.xpose.msra.mxu0 %v466
        %534 = vmatprep.subr.bf16.mxu0 0
        %535 = vmatpush1.bf16.xpose.msra.mxu0 %v469
        %536 = vmatprep.subr.bf16.mxu0 0
        %537 = vmatpush1.bf16.xpose.msra.mxu0 %v472
        %538 = vmatprep.subr.bf16.mxu0 0
        %539 = vmatpush1.bf16.xpose.msra.mxu0 %v475
        %540 = vmatprep.subr.bf16.mxu0 0
        %541 = vmatpush1.bf16.xpose.msra.mxu0 %v478
        %542 = vmatprep.subr.bf16.mxu0 0
        %543 = vmatpush1.bf16.xpose.msra.mxu0 %v481
        %544 = vmatprep.subr.bf16.mxu0 0
        %545 = vmatpush1.bf16.xpose.msra.mxu0 %v484
        %546 = vmatprep.subr.bf16.mxu0 0
        %547 = vmatpush1.bf16.xpose.msra.mxu0 %v487
        %548 = vmatprep.subr.bf16.mxu0 0
        %549 = vmatpush1.bf16.xpose.msra.mxu0 %v490
        %550 = vmatprep.subr.bf16.mxu0 0
        %551 = vmatpush1.bf16.xpose.msra.mxu0 %v493
        %552 = vmatprep.subr.bf16.mxu0 0
        %553 = vmatpush1.bf16.xpose.msra.mxu0 %v496
        %554 = vmatprep.mubr.bf16.mxu0 0
        %555 = vmatmul.mubr.bf16.gmra.mrb[0].mxu0 %v448
        %v556 = vpop.f32.mrb[0].mxu0
        %v557 = vadd.f32 0.0, %v556
        %v558 = vpop.f32.mrb[0].mxu0
        %v559 = vadd.f32 0.0, %v558
        %v560 = vpop.f32.mrb[0].mxu0
        %v561 = vpop.f32.mrb[0].mxu0
        %562 = vdwg.mxu0
        %563 = vmatprep.subr.bf16.mxu0 0
        %564 = vmatpush1.bf16.xpose.msra.mxu0 %v499
        %565 = vmatprep.subr.bf16.mxu0 0
        %566 = vmatpush1.bf16.xpose.msra.mxu0 %v502
        %567 = vmatprep.subr.bf16.mxu0 0
        %568 = vmatpush1.bf16.xpose.msra.mxu0 %v505
        %569 = vmatprep.subr.bf16.mxu0 0
        %570 = vmatpush1.bf16.xpose.msra.mxu0 %v508
        %571 = vmatprep.subr.bf16.mxu0 0
        %572 = vmatpush1.bf16.xpose.msra.mxu0 %v511
        %573 = vmatprep.subr.bf16.mxu0 0
        %574 = vmatpush1.bf16.xpose.msra.mxu0 %v514
        %575 = vmatprep.subr.bf16.mxu0 0
        %576 = vmatpush1.bf16.xpose.msra.mxu0 %v517
        %577 = vmatprep.subr.bf16.mxu0 0
        %578 = vmatpush1.bf16.xpose.msra.mxu0 %v520
        %579 = vmatprep.subr.bf16.mxu0 0
        %580 = vmatpush1.bf16.xpose.msra.mxu0 0
        %581 = vmatprep.subr.bf16.mxu0 0
        %582 = vmatpush1.bf16.xpose.msra.mxu0 0
        %583 = vmatprep.subr.bf16.mxu0 0
        %584 = vmatpush1.bf16.xpose.msra.mxu0 0
        %585 = vmatprep.subr.bf16.mxu0 0
        %586 = vmatpush1.bf16.xpose.msra.mxu0 0
        %587 = vmatprep.subr.bf16.mxu0 0
        %588 = vmatpush1.bf16.xpose.msra.mxu0 0
        %589 = vmatprep.subr.bf16.mxu0 0
        %590 = vmatpush1.bf16.xpose.msra.mxu0 0
        %591 = vmatprep.subr.bf16.mxu0 0
        %592 = vmatpush1.bf16.xpose.msra.mxu0 0
        %593 = vmatprep.subr.bf16.mxu0 0
        %594 = vmatpush1.bf16.xpose.msra.mxu0 0
        %595 = vmatprep.mubr.bf16.mxu0 0
        %596 = vmatmul.mubr.bf16.gmra.mrb[0].mxu0 %v448
        %v597 = vpop.f32.mrb[0].mxu0
        %v598 = vadd.f32 0.0, %v597
        %v599 = vpop.f32.mrb[0].mxu0
        %v600 = vpop.f32.mrb[0].mxu0
        %v601 = vpop.f32.mrb[0].mxu0
        %602 = vdwg.mxu0
        %v603 = vpack.c.bf16 %v557, %v557
        %604 = vst [vmem:[%s261] sm:$0xf] %v603
        %v605 = vpack.c.bf16 %v559, %v559
        %606 = vst [vmem:[%s268] sm:$0xf] %v605
        %v607 = vpack.c.bf16 %v598, %v598
        %608 = vst [vmem:[%s275] sm:$0xf] %v607
        %p609 = scmp.lt.s32.totalorder %s21, 1
        %s610 = scalar_select %p609, %s21, 1
        %p611 = scmp.lt.s32.totalorder %s22, 0
        %s612 = scalar_select %p611, %s22, 0
        %s613 = sadd.s32 %s612, %s610
        %s614 = smul.addr %s613, 4
        %s615 = scalar_lea.vmem %s2, %s614
        %p616 = scmp.lt.s32.totalorder %s21, 1
        %s617 = scalar_select %p616, %s21, 1
        %p618 = scmp.lt.s32.totalorder %s22, 0
        %s619 = scalar_select %p618, %s22, 0
        %s620 = sadd.s32 %s619, %s617
        %s621 = smul.addr %s620, 4
        %s622 = scalar_lea.vmem %s3, %s621
        %p623 = scmp.lt.s32.totalorder %s21, 1
        %s624 = scalar_select %p623, %s21, 1
        %p625 = scmp.lt.s32.totalorder %s22, 0
        %s626 = scalar_select %p625, %s22, 0
        %s627 = sadd.s32 %s626, %s624
        %s628 = smul.addr %s627, 4
        %s629 = scalar_lea.vmem %s4, %s628
        // Predicated region
        $region33: #{forward.2} parent=27 // pred_check
          %p630 = pneg %p98
        $region34: #{forward.2} parent=27 // pred_check_branch
          %632 = sbr.rel (%p630) target = $region36
        $region35: #{forward.2} parent=27 // pred_region
          _
        $region36: #{forward.2} parent=27 // pred_fallthru
          _
        // Predicated region
        $region37: #{forward.2} parent=27 // pred_check
          %p633 = pneg %p126
        $region38: #{forward.2} parent=27 // pred_check_branch
          %635 = sbr.rel (%p633) target = $region40
        $region39: #{forward.2} parent=27 // pred_region
          _
        $region40: #{forward.2} parent=27 // pred_fallthru
          _
        // Predicated region
        $region41: #{forward.2} parent=27 // pred_check
          %p636 = pneg %p154
        $region42: #{forward.2} parent=27 // pred_check_branch
          %638 = sbr.rel (%p636) target = $region44
        $region43: #{forward.2} parent=27 // pred_region
          _
        $region44: #{forward.2} parent=27 // pred_fallthru
          _
      $region28: #{forward.2} parent=5 // pred_fallthru
        _
      %p639 = scmp.le.s32.totalorder 2, %s12
      // Predicated region
      $region45: #{forward.2} parent=5 // pred_check
        %p640 = pneg %p639
      $region46: #{forward.2} parent=5 // pred_check_branch
        %642 = sbr.rel (%p640) target = $region48
      $region47: #{forward.2} parent=5 // pred_region
        %s643 = ssub.s32 %s12, 2
        // Predicated region
        $region49: #{forward.2} parent=47 // pred_check
          %p644 = pneg %p104
        $region50: #{forward.2} parent=47 // pred_check_branch
          %646 = sbr.rel (%p644) target = $region52
        $region51: #{forward.2} parent=47 // pred_region
          %p647 = scmp.lt.s32.totalorder %s23, 1
          %s648 = scalar_select %p647, %s23, 1
          %p649 = scmp.lt.s32.totalorder %s24, 0
          %s650 = scalar_select %p649, %s24, 0
          %s651 = sadd.s32 %s650, %s648
          %s652 = smul.addr %s651, 4
          %s653 = scalar_lea.vmem %s2, %s652
        $region52: #{forward.2} parent=47 // pred_fallthru
          _
        // Predicated region
        $region53: #{forward.2} parent=47 // pred_check
          %p654 = pneg %p132
        $region54: #{forward.2} parent=47 // pred_check_branch
          %656 = sbr.rel (%p654) target = $region56
        $region55: #{forward.2} parent=47 // pred_region
          %p657 = scmp.lt.s32.totalorder %s23, 1
          %s658 = scalar_select %p657, %s23, 1
          %p659 = scmp.lt.s32.totalorder %s24, 0
          %s660 = scalar_select %p659, %s24, 0
          %s661 = sadd.s32 %s660, %s658
          %s662 = smul.addr %s661, 4
          %s663 = scalar_lea.vmem %s3, %s662
        $region56: #{forward.2} parent=47 // pred_fallthru
          _
        // Predicated region
        $region57: #{forward.2} parent=47 // pred_check
          %p664 = pneg %p160
        $region58: #{forward.2} parent=47 // pred_check_branch
          %666 = sbr.rel (%p664) target = $region60
        $region59: #{forward.2} parent=47 // pred_region
          %p667 = scmp.lt.s32.totalorder %s23, 1
          %s668 = scalar_select %p667, %s23, 1
          %p669 = scmp.lt.s32.totalorder %s24, 0
          %s670 = scalar_select %p669, %s24, 0
          %s671 = sadd.s32 %s670, %s668
          %s672 = smul.addr %s671, 4
          %s673 = scalar_lea.vmem %s4, %s672
        $region60: #{forward.2} parent=47 // pred_fallthru
          _
      $region48: #{forward.2} parent=5 // pred_fallthru
        _
    $region6: #{forward.2} parent=1 // loop_footer
      %s16 = sadd.s32 1, %s12
    $region7: #{forward.2} parent=1 // loop_footer_branch
      %11 = sbr.rel target = $region3
    $region8: #{forward.2} parent=1 // loop_exit
      _
    %674 = vsyncpa [#allocation3], 1
    %s675 = scalar_lea.sflag [#allocation3], 1
    %676 = vsyncpa %s675, 1

</llo_original>
